<compile_context>
chip_gen: v7x
topology: tpu7x:2x2x1
jax: 0.10.0
libtpu: 0.0.40
codegen_flags: <defaults>
</compile_context>

<pallas_src>
import jax
import jax.numpy as jnp
from jax.experimental import pallas as pl
from jax.experimental.pallas import tpu as pltpu

LANES = 128     # lane width
TM_MAX = 2048   # max sublane rows per block


def _round_up(x, m):
    return ((x + m - 1) // m) * m


def _make_dice_kernel(tm, valid_rows, needs_mask):
    sub = tm // 8

    def kernel(pred_ref, true_ref, out_ref):
        p = pred_ref[...].astype(jnp.float32)
        t = true_ref[...].astype(jnp.float32)
        if needs_mask:
            # Rows past `valid_rows` in the partial last block contain
            # undefined data; zero them with a select (not a multiply) so NaN
            # garbage cannot propagate.
            row = (pl.program_id(0) * tm
                   + jax.lax.broadcasted_iota(jnp.int32, (tm, LANES), 0))
            valid = row < valid_rows
            p = jnp.where(valid, p, 0.0)
            t = jnp.where(valid, t, 0.0)
        pt = p * t
        # Fold the TM rows into a single (8, LANES) tile: elementwise vreg
        # adds only (no cross-lane/XLU work in the hot loop).
        t_part = t.reshape(sub, 8, LANES).sum(axis=0)
        pt_part = pt.reshape(sub, 8, LANES).sum(axis=0)
        p_part = p.reshape(sub, 8, LANES).sum(axis=0)
        out_ref[0, 0, :, :] = t_part     # partial sum(true)
        out_ref[0, 1, :, :] = pt_part    # partial sum(pred * true)
        out_ref[0, 2, :, :] = p_part     # partial sum(pred)

    return kernel


def _dice_sums(pred_flat, true_flat):
    """Returns (sum(true), sum(pred*true), sum(pred)) as f32 scalars."""
    n = pred_flat.shape[0]
    # Zero-pad only up to the next multiple of 8*128 = 1024 elements so the
    # data reshapes to (rows, 128) with rows % 8 == 0. Zero padding is exact
    # (contributes 0 to every sum). When n is already a multiple of 1024 this
    # is a pure metadata reshape - no extra HBM pass.
    n_pad = _round_up(n, 8 * LANES)
    pad = n_pad - n
    if pad:
        pred_flat = jnp.pad(pred_flat, (0, pad))
        true_flat = jnp.pad(true_flat, (0, pad))
    rows = n_pad // LANES
    pred2d = pred_flat.reshape(rows, LANES)
    true2d = true_flat.reshape(rows, LANES)

    tm = min(TM_MAX, rows)               # rows is a multiple of 8, so tm is too
    nblocks = (rows + tm - 1) // tm
    needs_mask = (rows % tm) != 0        # only a ragged last block needs masking

    kernel = _make_dice_kernel(tm, rows, needs_mask)

    partials = pl.pallas_call(
        kernel,
        out_shape=jax.ShapeDtypeStruct((nblocks, 3, 8, LANES), jnp.float32),
        grid_spec=pltpu.PrefetchScalarGridSpec(
            num_scalar_prefetch=0,
            grid=(nblocks,),
            in_specs=[
                pl.BlockSpec((tm, LANES), lambda i: (i, 0)),
                pl.BlockSpec((tm, LANES), lambda i: (i, 0)),
            ],
            out_specs=pl.BlockSpec((1, 3, 8, LANES), lambda i: (i, 0, 0, 0)),
        ),
        compiler_params=pltpu.CompilerParams(
            # Blocks are fully independent -> shard across both TCs on v7x.
            dimension_semantics=("parallel",),
            vmem_limit_bytes=32 * 1024 * 1024,
        ),
    )(pred2d, true2d)

    # Tiny (nblocks, 3, 8, 128) second-stage reduction in plain JAX.
    sums = partials.sum(axis=(0, 2, 3))
    return sums[0], sums[1], sums[2]


def dice_score(pred, true, beta=1.0, eps=1e-08):
    """Matches DiceLoss.score: pred/true any shape (e.g. (B,1,H,W)), flattened."""
    pred_flat = pred.reshape(-1)
    true_flat = true.reshape(-1)
    assert pred_flat.shape[0] == true_flat.shape[0], (
        f"pred.shape:{pred.shape},  true.shape:{true.shape}")
    n_pos, tp, sum_p = _dice_sums(pred_flat, true_flat)
    fp = sum_p - tp                      # sum(pred*(1-true)) == sum(pred) - tp
    precis = tp / (tp + fp + eps)
    recall = tp / (n_pos + eps)
    beta2 = beta ** 2
    dice = (1.0 + beta2) * (precis * recall) / (beta2 * precis + recall + eps)
    return dice


def dice_loss(pred, true, beta=1.0):
    """Matches DiceLoss.forward: 1 - score(pred, true) (score uses eps=1e-8)."""
    return 1.0 - dice_score(pred, true, beta=beta, eps=1e-08)


def _reference_dice_loss(pred, true, beta=1.0, eps=1e-08):
    p = pred.reshape(-1).astype(jnp.float32)
    t = true.reshape(-1).astype(jnp.float32)
    n_pos = t.sum()
    tp = (p * t).sum()
    fp = (p * (1.0 - t)).sum()
    precis = tp / (tp + fp + eps)
    recall = tp / (n_pos + eps)
    beta2 = beta ** 2
    dice = (1.0 + beta2) * (precis * recall) / (beta2 * precis + recall + eps)
    return 1.0 - dice


if __name__ == "__main__":
    key = jax.random.PRNGKey(0)
    k1, k2 = jax.random.split(key)
    B, C, H, W = 2, 1, 16, 16
    # pred: probabilities after sigmoid; true: binary mask
    pred = jax.nn.sigmoid(jax.random.normal(k1, (B, C, H, W), dtype=jnp.float32))
    true = (jax.random.uniform(k2, (B, C, H, W)) > 0.5).astype(jnp.float32)

    loss = jax.block_until_ready(dice_loss(pred, true, beta=1.0))
    ref = _reference_dice_loss(pred, true, beta=1.0)

    assert jnp.allclose(loss, ref, atol=1e-5, rtol=1e-5), (loss, ref)
    print("KERNEL_OK")
</pallas_src>

<mosaic_0001>
module attributes {stable_mosaic.version = 11 : i64} {
  func.func @kernel(%arg0: i32, %arg1: memref<8x128xf32, #tpu.memory_space<vmem>>, %arg2: memref<8x128xf32, #tpu.memory_space<vmem>>, %arg3: memref<1x3x8x128xf32, #tpu.memory_space<vmem>>) attributes {dimension_semantics = [#tpu.dimension_semantics<parallel>], iteration_bounds = array<i64: 1>, scalar_prefetch = 0 : i64, scratch_operands = 0 : i64, tpu.core_type = #tpu.core_type<tc>, window_params = [{transform_indices = @transform_0, window_bounds = array<i64: 8, 128>}, {transform_indices = @transform_1, window_bounds = array<i64: 8, 128>}, {transform_indices = @transform_2, window_bounds = array<i64: 1, 3, 8, 128>}]} {
    %c0 = arith.constant 0 : index
    %c0_0 = arith.constant 0 : index
    %0 = vector.load %arg1[%c0, %c0_0] : memref<8x128xf32, #tpu.memory_space<vmem>>, vector<8x128xf32>
    %c0_1 = arith.constant 0 : index
    %c0_2 = arith.constant 0 : index
    %1 = vector.load %arg2[%c0_1, %c0_2] : memref<8x128xf32, #tpu.memory_space<vmem>>, vector<8x128xf32>
    %2 = arith.mulf %0, %1 : vector<8x128xf32>
    %3 = vector.shape_cast %1 : vector<8x128xf32> to vector<1x8x128xf32>
    %cst = arith.constant dense<0.000000e+00> : vector<8x128xf32>
    %4 = vector.multi_reduction <add>, %3, %cst [0] : vector<1x8x128xf32> to vector<8x128xf32>
    %5 = vector.shape_cast %2 : vector<8x128xf32> to vector<1x8x128xf32>
    %cst_3 = arith.constant dense<0.000000e+00> : vector<8x128xf32>
    %6 = vector.multi_reduction <add>, %5, %cst_3 [0] : vector<1x8x128xf32> to vector<8x128xf32>
    %7 = vector.shape_cast %0 : vector<8x128xf32> to vector<1x8x128xf32>
    %cst_4 = arith.constant dense<0.000000e+00> : vector<8x128xf32>
    %8 = vector.multi_reduction <add>, %7, %cst_4 [0] : vector<1x8x128xf32> to vector<8x128xf32>
    %c0_5 = arith.constant 0 : index
    %c0_6 = arith.constant 0 : index
    %c0_7 = arith.constant 0 : index
    %c0_8 = arith.constant 0 : index
    %9 = vector.load %arg3[%c0_5, %c0_6, %c0_7, %c0_8] : memref<1x3x8x128xf32, #tpu.memory_space<vmem>>, vector<1x1x8x128xf32>
    %10 = vector.shape_cast %9 : vector<1x1x8x128xf32> to vector<8x128xf32>
    %11 = vector.shape_cast %4 : vector<8x128xf32> to vector<1x1x8x128xf32>
    tpu.vector_store %arg3[%c0_5, %c0_6, %c0_7, %c0_8], %11 {strides = array<i32>} : memref<1x3x8x128xf32, #tpu.memory_space<vmem>>, vector<1x1x8x128xf32>,
    %c0_9 = arith.constant 0 : index
    %c1 = arith.constant 1 : index
    %c0_10 = arith.constant 0 : index
    %c0_11 = arith.constant 0 : index
    %12 = vector.load %arg3[%c0_9, %c1, %c0_10, %c0_11] : memref<1x3x8x128xf32, #tpu.memory_space<vmem>>, vector<1x1x8x128xf32>
    %13 = vector.shape_cast %12 : vector<1x1x8x128xf32> to vector<8x128xf32>
    %14 = vector.shape_cast %6 : vector<8x128xf32> to vector<1x1x8x128xf32>
    tpu.vector_store %arg3[%c0_9, %c1, %c0_10, %c0_11], %14 {strides = array<i32>} : memref<1x3x8x128xf32, #tpu.memory_space<vmem>>, vector<1x1x8x128xf32>,
    %c0_12 = arith.constant 0 : index
    %c2 = arith.constant 2 : index
    %c0_13 = arith.constant 0 : index
    %c0_14 = arith.constant 0 : index
    %15 = vector.load %arg3[%c0_12, %c2, %c0_13, %c0_14] : memref<1x3x8x128xf32, #tpu.memory_space<vmem>>, vector<1x1x8x128xf32>
    %16 = vector.shape_cast %15 : vector<1x1x8x128xf32> to vector<8x128xf32>
    %17 = vector.shape_cast %8 : vector<8x128xf32> to vector<1x1x8x128xf32>
    tpu.vector_store %arg3[%c0_12, %c2, %c0_13, %c0_14], %17 {strides = array<i32>} : memref<1x3x8x128xf32, #tpu.memory_space<vmem>>, vector<1x1x8x128xf32>,
    return
  }
  func.func @transform_0(%arg0: i32) -> (i32, i32) {
    %c0_i32 = arith.constant 0 : i32
    %c0_i32_0 = arith.constant 0 : i32
    return %arg0, %c0_i32 : i32, i32
  }
  func.func @transform_1(%arg0: i32) -> (i32, i32) {
    %c0_i32 = arith.constant 0 : i32
    %c0_i32_0 = arith.constant 0 : i32
    return %arg0, %c0_i32 : i32, i32
  }
  func.func @transform_2(%arg0: i32) -> (i32, i32, i32, i32) {
    %c0_i32 = arith.constant 0 : i32
    %c0_i32_0 = arith.constant 0 : i32
    %c0_i32_1 = arith.constant 0 : i32
    %c0_i32_2 = arith.constant 0 : i32
    return %arg0, %c0_i32, %c0_i32_0, %c0_i32_1 : i32, i32, i32, i32
  }
}

</mosaic_0001>

<llo_original>
// kernel: tpu_custom_call.1
$region0: #{tpu_custom_call.1}
  #allocation0 [shape = 'u32[]', space=smem, size = 0x4, offset = 0x4, fixed_abs, tag = 'smem constant byte address 0x4 - core index']
  #allocation1 [shape = 'u32[144,128]{1,0:T(1,128)}', space=vmem, size = 0x12000, scoped, tag = 'internal scratch']
  %s0 = inlined_call_operand.hbm [shape: f32[8,128], index: 0, kind: input, shape index: {}]
  %s1 = inlined_call_operand.hbm [shape: f32[8,128], index: 1, kind: input, shape index: {}]
  %s2 = inlined_call_operand.hbm [shape: f32[1,3,8,128], index: 2, kind: output, shape index: {}]
  %s3 = sld [smem:[#allocation0]]
  $region26: #{tpu_custom_call.1} parent=0
    _
  %s5 = ssub.s32 1, %s3
  %s6 = scalar_select 0, %s5, %s3
  $region1: #{tpu_custom_call.1} parent=0
    #allocation2 [shape = 'u8[4096]{0}', space=vmem, size = 0x1000, scoped, tag = 'input window, operand 0, single buffered']
    #allocation3 [shape = 's32[1]{0}', space=sflag, size = 0x4, scoped, tag = 'scoped memory for tpu_custom_call.1']
    #allocation4 [shape = 's32[1]{0}', space=sflag, size = 0x4, scoped, tag = 'scoped memory for tpu_custom_call.1']
    #allocation5 [shape = 'u8[4096]{0}', space=vmem, size = 0x1000, scoped, tag = 'input window, operand 1, single buffered']
    #allocation6 [shape = 's32[1]{0}', space=sflag, size = 0x4, scoped, tag = 'scoped memory for tpu_custom_call.1']
    #allocation7 [shape = 'u8[12288]{0}', space=vmem, size = 0x3000, scoped, tag = 'output window, operand 0, single buffered']
    %7 = vsyncpa [#allocation3], 0
    %8 = vsyncpa [#allocation6], 0
    %9 = vsyncpa [#allocation4], 0
    // Predicated region
    $region2: #{tpu_custom_call.1} parent=1 // pred_check
      _
    $region3: #{tpu_custom_call.1} parent=1 // pred_check_branch
      %11 = sbr.rel (0) target = $region5
    $region4: #{tpu_custom_call.1} parent=1 // pred_region
      %s13 = ssub.s32 128, 128
      %14 = vsyncadd [#allocation3], %s13
      %s16 = sshll.u32 [#allocation2], 4
      %s17 = int_to_ptr.vmem [resolvable:$true] %s16
      %19 = dma.hbm_to_vmem [thread:$0]  %s0, 128, %s17, [#allocation3]
    $region5: #{tpu_custom_call.1} parent=1 // pred_fallthru
      _
    // Predicated region
    $region6: #{tpu_custom_call.1} parent=1 // pred_check
      _
    $region7: #{tpu_custom_call.1} parent=1 // pred_check_branch
      %21 = sbr.rel (0) target = $region9
    $region8: #{tpu_custom_call.1} parent=1 // pred_region
      %s23 = ssub.s32 128, 128
      %24 = vsyncadd [#allocation6], %s23
      %s26 = sshll.u32 [#allocation5], 4
      %s27 = int_to_ptr.vmem [resolvable:$true] %s26
      %29 = dma.hbm_to_vmem [thread:$0]  %s1, 128, %s27, [#allocation6]
    $region9: #{tpu_custom_call.1} parent=1 // pred_fallthru
      _
    // Predicated region
    $region10: #{tpu_custom_call.1} parent=1 // pred_check
      _
    $region11: #{tpu_custom_call.1} parent=1 // pred_check_branch
      %31 = sbr.rel (0) target = $region13
    $region12: #{tpu_custom_call.1} parent=1 // pred_region
      %32 = dma.done [#allocation3], 128
    $region13: #{tpu_custom_call.1} parent=1 // pred_fallthru
      _
    // Predicated region
    $region14: #{tpu_custom_call.1} parent=1 // pred_check
      _
    $region15: #{tpu_custom_call.1} parent=1 // pred_check_branch
      %34 = sbr.rel (0) target = $region17
    $region16: #{tpu_custom_call.1} parent=1 // pred_region
      %35 = dma.done [#allocation6], 128
    $region17: #{tpu_custom_call.1} parent=1 // pred_fallthru
      _
    %v36 = vld [vmem:[#allocation2] sm:$0xff]
    %v37 = vld [vmem:[#allocation5] sm:$0xff]
    %v38 = vmul.f32 %v36, %v37
    %v39 = vadd.f32 %v37, 0.0
    %v40 = vadd.f32 %v38, 0.0
    %v41 = vadd.f32 %v36, 0.0
    %42 = vst [vmem:[#allocation7] sm:$0xff] %v39
    %s43 = scalar_lea.vmem [#allocation7], 8
    %44 = vst [vmem:[%s43] sm:$0xff] %v40
    %s45 = scalar_lea.vmem [#allocation7], 16
    %46 = vst [vmem:[%s45] sm:$0xff] %v41
    // Predicated region
    $region18: #{tpu_custom_call.1} parent=1 // pred_check
      _
    $region19: #{tpu_custom_call.1} parent=1 // pred_check_branch
      %48 = sbr.rel (0) target = $region21
    $region20: #{tpu_custom_call.1} parent=1 // pred_region
      %s50 = ssub.s32 384, 384
      %51 = vsyncadd [#allocation4], %s50
      %s52 = sshll.u32 [#allocation7], 4
      %s53 = int_to_ptr.vmem [resolvable:$true] %s52
      %58 = dma.vmem_to_hbm [thread:$0]  %s53, 384, %s2, [#allocation4], 128, 128, 8
    $region21: #{tpu_custom_call.1} parent=1 // pred_fallthru
      _
    // Predicated region
    $region22: #{tpu_custom_call.1} parent=1 // pred_check
      _
    $region23: #{tpu_custom_call.1} parent=1 // pred_check_branch
      %60 = sbr.rel (0) target = $region25
    $region24: #{tpu_custom_call.1} parent=1 // pred_region
      %61 = dma.done [#allocation4], 384
    $region25: #{tpu_custom_call.1} parent=1 // pred_fallthru
      _
    %62 = vsyncpa [#allocation3], 1
    %63 = vsyncpa [#allocation6], 1
    %64 = vsyncpa [#allocation4], 1

</llo_original>
